<compile_context>
chip_gen: v7x
topology: tpu7x:2x2x1
jax: 0.10.0
libtpu: 0.0.40
codegen_flags: <defaults>
</compile_context>

<pallas_src>
import jax
import jax.numpy as jnp
from jax import lax
from jax.experimental import pallas as pl
from jax.experimental.pallas import tpu as pltpu


def _round_up(x, m):
    return ((x + m - 1) // m) * m


def _proj_kernel_single_k(x_ref, w_ref, b_ref, o_ref):
    """Whole reduction (d_model) in one MXU call; grid = (M tiles, V tiles)."""
    acc = lax.dot_general(
        x_ref[...],
        w_ref[...],
        dimension_numbers=(((1,), (1,)), ((), ())),  # x @ w.T, no materialized transpose
        preferred_element_type=jnp.float32,
    )
    o_ref[...] = (acc + b_ref[...].astype(jnp.float32)).astype(o_ref.dtype)


def _proj_kernel_split_k(x_ref, w_ref, b_ref, o_ref, acc_ref):
    """Reduction split over the last ('arbitrary') grid axis; f32 accumulator."""
    k = pl.program_id(2)

    @pl.when(k == 0)
    def _():
        acc_ref[...] = jnp.zeros_like(acc_ref)

    acc_ref[...] += lax.dot_general(
        x_ref[...],
        w_ref[...],
        dimension_numbers=(((1,), (1,)), ((), ())),
        preferred_element_type=jnp.float32,
    )

    @pl.when(k == pl.num_programs(2) - 1)
    def _():
        o_ref[...] = (acc_ref[...] + b_ref[...].astype(jnp.float32)).astype(o_ref.dtype)


def projection_layer(x, weight, bias, *, tm=None, tn=None, tk=None,
                     out_dtype=None, compute_dtype=None):
    """y = x @ weight.T + bias   (PyTorch nn.Linear semantics).

    x:      (batch, seq, d_model)
    weight: (vocab, d_model)   -- native PyTorch Linear layout (NOT transposed)
    bias:   (vocab,)
    returns (batch, seq, vocab), dtype = out_dtype or x.dtype
    """
    batch, seq, d_model = x.shape
    vocab = weight.shape[0]
    out_dtype = jnp.dtype(out_dtype) if out_dtype is not None else x.dtype

    if compute_dtype is not None:
        x = x.astype(compute_dtype)
        weight = weight.astype(compute_dtype)

    M = batch * seq
    x2 = x.reshape(M, d_model)

    # ---- tile selection -------------------------------------------------
    # K: collapse the reduction axis whenever d_model fits a single tile.
    if tk is None:
        tk = d_model if d_model <= 2048 else 512
    tk = min(tk, d_model)
    single_k = tk == d_model
    if not single_k:
        tk = _round_up(tk, 128)               # lane-aligned K chunks

    # N (vocab): lane-dense output, big multiple of 128.
    if tn is None:
        tn = min(_round_up(vocab, 128), 1024)
    tn = min(_round_up(tn, 128), _round_up(vocab, 128))

    # M: multiple of 8 sublanes, capped so double-buffered tiles stay well
    # inside the v7x 64 MiB VMEM budget.
    if tm is None:
        tm = min(_round_up(M, 8), 512)
    tm = min(_round_up(tm, 8), _round_up(M, 8))

    # ---- padding to tile multiples (replaces hard divisibility asserts) --
    Mp = _round_up(M, tm)
    Vp = _round_up(vocab, tn)
    Kp = d_model if single_k else _round_up(d_model, tk)

    if Mp != M or Kp != d_model:
        x2 = jnp.pad(x2, ((0, Mp - M), (0, Kp - d_model)))
    w = weight
    if Vp != vocab or Kp != d_model:
        w = jnp.pad(w, ((0, Vp - vocab), (0, Kp - d_model)))
    b2 = bias.reshape(1, vocab)
    if Vp != vocab:
        b2 = jnp.pad(b2, ((0, 0), (0, Vp - vocab)))

    # ---- cost estimate / compiler params ---------------------------------
    flops = 2 * Mp * Vp * Kp
    bytes_accessed = int(
        x2.size * x2.dtype.itemsize
        + w.size * w.dtype.itemsize
        + b2.size * b2.dtype.itemsize
        + Mp * Vp * out_dtype.itemsize
    )
    cost = pl.CostEstimate(flops=flops, transcendentals=0,
                           bytes_accessed=bytes_accessed)
    vmem_limit = 48 * 1024 * 1024  # fits all generations incl. v7x (64 MiB/TC)

    if single_k:
        grid = (Mp // tm, Vp // tn)
        y2 = pl.pallas_call(
            _proj_kernel_single_k,
            out_shape=jax.ShapeDtypeStruct((Mp, Vp), out_dtype),
            grid_spec=pltpu.PrefetchScalarGridSpec(
                num_scalar_prefetch=0,
                grid=grid,
                in_specs=[
                    pl.BlockSpec((tm, Kp), lambda i, j: (i, 0)),   # x row tile
                    pl.BlockSpec((tn, Kp), lambda i, j: (j, 0)),   # W native layout
                    pl.BlockSpec((1, tn), lambda i, j: (0, j)),    # bias tile
                ],
                out_specs=pl.BlockSpec((tm, tn), lambda i, j: (i, j)),
            ),
            compiler_params=pltpu.CompilerParams(
                dimension_semantics=("parallel", "parallel"),
                vmem_limit_bytes=vmem_limit,
            ),
            cost_estimate=cost,
        )(x2, w, b2)
    else:
        grid = (Mp // tm, Vp // tn, Kp // tk)
        y2 = pl.pallas_call(
            _proj_kernel_split_k,
            out_shape=jax.ShapeDtypeStruct((Mp, Vp), out_dtype),
            grid_spec=pltpu.PrefetchScalarGridSpec(
                num_scalar_prefetch=0,
                grid=grid,
                in_specs=[
                    pl.BlockSpec((tm, tk), lambda i, j, k: (i, k)),  # x tile
                    pl.BlockSpec((tn, tk), lambda i, j, k: (j, k)),  # W native layout
                    pl.BlockSpec((1, tn), lambda i, j, k: (0, j)),   # bias tile
                ],
                out_specs=pl.BlockSpec((tm, tn), lambda i, j, k: (i, j)),
                scratch_shapes=[pltpu.VMEM((tm, tn), jnp.float32)],
            ),
            compiler_params=pltpu.CompilerParams(
                dimension_semantics=("parallel", "parallel", "arbitrary"),
                vmem_limit_bytes=vmem_limit,
            ),
            cost_estimate=cost,
        )(x2, w, b2)

    y2 = y2[:M, :vocab]
    return y2.reshape(batch, seq, vocab)


if __name__ == "__main__":
    key = jax.random.PRNGKey(0)

    def make_inputs(key, batch, seq, d_model, vocab):
        kx, kw, kb = jax.random.split(key, 3)
        bound = 1.0 / (d_model ** 0.5)   # nn.Linear default init range
        weight = jax.random.uniform(kw, (vocab, d_model), jnp.float32, -bound, bound)
        bias = jax.random.uniform(kb, (vocab,), jnp.float32, -bound, bound)
        x = jax.random.normal(kx, (batch, seq, d_model), jnp.float32)
        return x, weight, bias

    # Case 1: small, aligned shapes (single-K fast path).
    x, w, b = make_inputs(key, batch=2, seq=8, d_model=128, vocab=256)
    y = jax.block_until_ready(projection_layer(x, w, b))
    y_ref = x @ w.T + b
    assert y.shape == (2, 8, 256)
    assert jnp.allclose(y, y_ref, atol=1e-4, rtol=1e-4)

    # Case 2: ragged shapes exercising the padding path (no divisibility reqs).
    x, w, b = make_inputs(jax.random.PRNGKey(1), batch=2, seq=7, d_model=96, vocab=200)
    y = jax.block_until_ready(projection_layer(x, w, b))
    y_ref = x @ w.T + b
    assert y.shape == (2, 7, 200)
    assert jnp.allclose(y, y_ref, atol=1e-4, rtol=1e-4)

    # Case 3: split-K reduction path (tk < d_model -> K grid axis + accumulator).
    x, w, b = make_inputs(jax.random.PRNGKey(2), batch=2, seq=8, d_model=256, vocab=256)
    y = jax.block_until_ready(projection_layer(x, w, b, tk=128))
    y_ref = x @ w.T + b
    assert jnp.allclose(y, y_ref, atol=1e-4, rtol=1e-4)

    print("KERNEL_OK")
</pallas_src>

<mosaic_0001>
module attributes {stable_mosaic.version = 11 : i64} {
  func.func @_proj_kernel_single_k(%arg0: i32, %arg1: i32, %arg2: memref<16x128xf32, #tpu.memory_space<vmem>>, %arg3: memref<256x128xf32, #tpu.memory_space<vmem>>, %arg4: memref<1x256xf32, #tpu.memory_space<vmem>>, %arg5: memref<16x256xf32, #tpu.memory_space<vmem>>) attributes {dimension_semantics = [#tpu.dimension_semantics<parallel>, #tpu.dimension_semantics<parallel>], iteration_bounds = array<i64: 1, 1>, scalar_prefetch = 0 : i64, scratch_operands = 0 : i64, tpu.core_type = #tpu.core_type<tc>, window_params = [{transform_indices = @transform_0, window_bounds = array<i64: 16, 128>}, {transform_indices = @transform_1, window_bounds = array<i64: 256, 128>}, {transform_indices = @transform_2, window_bounds = array<i64: 1, 256>}, {transform_indices = @transform_3, window_bounds = array<i64: 16, 256>}]} {
    %c0 = arith.constant 0 : index
    %c0_0 = arith.constant 0 : index
    %0 = vector.load %arg2[%c0, %c0_0] : memref<16x128xf32, #tpu.memory_space<vmem>>, vector<16x128xf32>
    %c0_1 = arith.constant 0 : index
    %c0_2 = arith.constant 0 : index
    %1 = vector.load %arg3[%c0_1, %c0_2] : memref<256x128xf32, #tpu.memory_space<vmem>>, vector<256x128xf32>
    %cst = arith.constant dense<0.000000e+00> : vector<16x256xf32>
    %2 = tpu.matmul %0, %1, %cst {dimension_numbers = #tpu.dot_dimension_numbers<[1], [1], [0], [0], [0, 0, 1, 0], [], []>} : vector<16x128xf32>, vector<256x128xf32>, vector<16x256xf32> -> vector<16x256xf32>
    %c0_3 = arith.constant 0 : index
    %c0_4 = arith.constant 0 : index
    %3 = vector.load %arg4[%c0_3, %c0_4] : memref<1x256xf32, #tpu.memory_space<vmem>>, vector<1x256xf32>
    %4 = vector.broadcast %3 : vector<1x256xf32> to vector<16x256xf32>
    %5 = arith.addf %2, %4 : vector<16x256xf32>
    %c0_5 = arith.constant 0 : index
    %c0_6 = arith.constant 0 : index
    %6 = vector.load %arg5[%c0_5, %c0_6] : memref<16x256xf32, #tpu.memory_space<vmem>>, vector<16x256xf32>
    tpu.vector_store %arg5[%c0_5, %c0_6], %5 {strides = array<i32>} : memref<16x256xf32, #tpu.memory_space<vmem>>, vector<16x256xf32>,
    return
  }
  func.func @transform_0(%arg0: i32, %arg1: i32) -> (i32, i32) {
    %c0_i32 = arith.constant 0 : i32
    %c0_i32_0 = arith.constant 0 : i32
    return %arg0, %c0_i32 : i32, i32
  }
  func.func @transform_1(%arg0: i32, %arg1: i32) -> (i32, i32) {
    %c0_i32 = arith.constant 0 : i32
    %c0_i32_0 = arith.constant 0 : i32
    return %arg1, %c0_i32 : i32, i32
  }
  func.func @transform_2(%arg0: i32, %arg1: i32) -> (i32, i32) {
    %c0_i32 = arith.constant 0 : i32
    %c0_i32_0 = arith.constant 0 : i32
    return %c0_i32, %arg1 : i32, i32
  }
  func.func @transform_3(%arg0: i32, %arg1: i32) -> (i32, i32) {
    %c0_i32 = arith.constant 0 : i32
    return %arg0, %arg1 : i32, i32
  }
}

</mosaic_0001>

<llo_original>
// kernel: tpu_custom_call.1
$region0: #{tpu_custom_call.1}
  #allocation0 [shape = 'u32[]', space=smem, size = 0x4, offset = 0x4, fixed_abs, tag = 'smem constant byte address 0x4 - core index']
  #allocation1 [shape = 'u32[144,128]{1,0:T(1,128)}', space=vmem, size = 0x12000, scoped, tag = 'internal scratch']
  %s0 = inlined_call_operand.hbm [shape: f32[16,128], index: 0, kind: input, shape index: {}]
  %s1 = inlined_call_operand.hbm [shape: f32[256,128], index: 1, kind: input, shape index: {}]
  %s2 = inlined_call_operand.vmem [shape: f32[1,256], index: 2, kind: input, shape index: {}]
  %s3 = inlined_call_operand.hbm [shape: f32[16,256], index: 3, kind: output, shape index: {}]
  %s4 = sld [smem:[#allocation0]]
  $region30: #{tpu_custom_call.1} parent=0
    _
  %s6 = ssub.s32 1, %s4
  %s7 = scalar_select 0, %s6, %s4
  $region1: #{tpu_custom_call.1} parent=0
    #allocation2 [shape = 'u8[8192]{0}', space=vmem, size = 0x2000, scoped, tag = 'input window, operand 0, single buffered']
    #allocation3 [shape = 's32[1]{0}', space=sflag, size = 0x4, scoped, tag = 'scoped memory for tpu_custom_call.1']
    #allocation4 [shape = 's32[1]{0}', space=sflag, size = 0x4, scoped, tag = 'scoped memory for tpu_custom_call.1']
    #allocation5 [shape = 'u8[131072]{0}', space=vmem, size = 0x20000, scoped, tag = 'input window, operand 1, single buffered']
    #allocation6 [shape = 's32[1]{0}', space=sflag, size = 0x4, scoped, tag = 'scoped memory for tpu_custom_call.1']
    #allocation7 [shape = 'u8[16384]{0}', space=vmem, size = 0x4000, scoped, tag = 'output window, operand 0, single buffered']
    %8 = vsyncpa [#allocation3], 0
    %9 = vsyncpa [#allocation6], 0
    %10 = vsyncpa [#allocation4], 0
    // Predicated region
    $region2: #{tpu_custom_call.1} parent=1 // pred_check
      _
    $region3: #{tpu_custom_call.1} parent=1 // pred_check_branch
      %12 = sbr.rel (0) target = $region5
    $region4: #{tpu_custom_call.1} parent=1 // pred_region
      %s14 = ssub.s32 256, 256
      %15 = vsyncadd [#allocation3], %s14
      %s16 = sshll.u32 [#allocation2], 4
      %s17 = int_to_ptr.vmem [resolvable:$true] %s16
      %22 = dma.hbm_to_vmem [thread:$0]  %s0, 256, %s17, [#allocation3], 128, 128, 8
    $region5: #{tpu_custom_call.1} parent=1 // pred_fallthru
      _
    // Predicated region
    $region6: #{tpu_custom_call.1} parent=1 // pred_check
      _
    $region7: #{tpu_custom_call.1} parent=1 // pred_check_branch
      %24 = sbr.rel (0) target = $region9
    $region8: #{tpu_custom_call.1} parent=1 // pred_region
      %s26 = ssub.s32 4096, 4096
      %27 = vsyncadd [#allocation6], %s26
      %s28 = sshll.u32 [#allocation5], 4
      %s29 = int_to_ptr.vmem [resolvable:$true] %s28
      %34 = dma.hbm_to_vmem [thread:$0]  %s1, 4096, %s29, [#allocation6], 128, 128, 8
    $region9: #{tpu_custom_call.1} parent=1 // pred_fallthru
      _
    // Predicated region
    $region10: #{tpu_custom_call.1} parent=1 // pred_check
      _
    $region11: #{tpu_custom_call.1} parent=1 // pred_check_branch
      %36 = sbr.rel (0) target = $region13
    $region12: #{tpu_custom_call.1} parent=1 // pred_region
      _
    $region13: #{tpu_custom_call.1} parent=1 // pred_fallthru
      _
    // Predicated region
    $region14: #{tpu_custom_call.1} parent=1 // pred_check
      _
    $region15: #{tpu_custom_call.1} parent=1 // pred_check_branch
      %38 = sbr.rel (0) target = $region17
    $region16: #{tpu_custom_call.1} parent=1 // pred_region
      %39 = dma.done [#allocation3], 256
    $region17: #{tpu_custom_call.1} parent=1 // pred_fallthru
      _
    // Predicated region
    $region18: #{tpu_custom_call.1} parent=1 // pred_check
      _
    $region19: #{tpu_custom_call.1} parent=1 // pred_check_branch
      %41 = sbr.rel (0) target = $region21
    $region20: #{tpu_custom_call.1} parent=1 // pred_region
      %42 = dma.done [#allocation6], 4096
    $region21: #{tpu_custom_call.1} parent=1 // pred_fallthru
      _
    %v43 = vld [vmem:[#allocation2] sm:$0xff]
    %v44 = vld [vmem:[#allocation2 + $0x8] sm:$0xff]
    %v45 = vld [vmem:[#allocation5] sm:$0xff]
    %v46 = vld [vmem:[#allocation5 + $0x8] sm:$0xff]
    %v47 = vld [vmem:[#allocation5 + $0x10] sm:$0xff]
    %v48 = vld [vmem:[#allocation5 + $0x18] sm:$0xff]
    %v49 = vld [vmem:[#allocation5 + $0x20] sm:$0xff]
    %v50 = vld [vmem:[#allocation5 + $0x28] sm:$0xff]
    %v51 = vld [vmem:[#allocation5 + $0x30] sm:$0xff]
    %v52 = vld [vmem:[#allocation5 + $0x38] sm:$0xff]
    %v53 = vld [vmem:[#allocation5 + $0x40] sm:$0xff]
    %v54 = vld [vmem:[#allocation5 + $0x48] sm:$0xff]
    %v55 = vld [vmem:[#allocation5 + $0x50] sm:$0xff]
    %v56 = vld [vmem:[#allocation5 + $0x58] sm:$0xff]
    %v57 = vld [vmem:[#allocation5 + $0x60] sm:$0xff]
    %v58 = vld [vmem:[#allocation5 + $0x68] sm:$0xff]
    %v59 = vld [vmem:[#allocation5 + $0x70] sm:$0xff]
    %v60 = vld [vmem:[#allocation5 + $0x78] sm:$0xff]
    %v61 = vld [vmem:[#allocation5 + $0x80] sm:$0xff]
    %v62 = vld [vmem:[#allocation5 + $0x88] sm:$0xff]
    %v63 = vld [vmem:[#allocation5 + $0x90] sm:$0xff]
    %v64 = vld [vmem:[#allocation5 + $0x98] sm:$0xff]
    %v65 = vld [vmem:[#allocation5 + $0xa0] sm:$0xff]
    %v66 = vld [vmem:[#allocation5 + $0xa8] sm:$0xff]
    %v67 = vld [vmem:[#allocation5 + $0xb0] sm:$0xff]
    %v68 = vld [vmem:[#allocation5 + $0xb8] sm:$0xff]
    %v69 = vld [vmem:[#allocation5 + $0xc0] sm:$0xff]
    %v70 = vld [vmem:[#allocation5 + $0xc8] sm:$0xff]
    %v71 = vld [vmem:[#allocation5 + $0xd0] sm:$0xff]
    %v72 = vld [vmem:[#allocation5 + $0xd8] sm:$0xff]
    %v73 = vld [vmem:[#allocation5 + $0xe0] sm:$0xff]
    %v74 = vld [vmem:[#allocation5 + $0xe8] sm:$0xff]
    %v75 = vld [vmem:[#allocation5 + $0xf0] sm:$0xff]
    %v76 = vld [vmem:[#allocation5 + $0xf8] sm:$0xff]
    %v77 = vld [vmem:[%s2] sm:$0x3]
    %v79 = vlaneseq
    %v80 = vshrl.u32 %v79, 7
    %v81 = vsub.s32 0, %v80
    %v82 = vrot.slane %v77, %v81
    %v83 = vlaneseq
    %v84 = vshrl.u32 %v83, 7
    %v85 = vsub.s32 1, %v84
    %v86 = vrot.slane %v77, %v85
    %89 = vmatprep.subr.mxu0 0.0
    %90 = vmatpush1.xpose.msra.mxu0 %v45
    %91 = vmatprep.subr.mxu0 0.0
    %92 = vmatpush1.xpose.msra.mxu0 %v46
    %93 = vmatprep.subr.mxu0 0.0
    %94 = vmatpush1.xpose.msra.mxu0 %v47
    %95 = vmatprep.subr.mxu0 0.0
    %96 = vmatpush1.xpose.msra.mxu0 %v48
    %97 = vmatprep.subr.mxu0 0.0
    %98 = vmatpush1.xpose.msra.mxu0 %v49
    %99 = vmatprep.subr.mxu0 0.0
    %100 = vmatpush1.xpose.msra.mxu0 %v50
    %101 = vmatprep.subr.mxu0 0.0
    %102 = vmatpush1.xpose.msra.mxu0 %v51
    %103 = vmatprep.subr.mxu0 0.0
    %104 = vmatpush1.xpose.msra.mxu0 %v52
    %105 = vmatprep.subr.mxu0 0.0
    %106 = vmatpush1.xpose.msra.mxu0 %v53
    %107 = vmatprep.subr.mxu0 0.0
    %108 = vmatpush1.xpose.msra.mxu0 %v54
    %109 = vmatprep.subr.mxu0 0.0
    %110 = vmatpush1.xpose.msra.mxu0 %v55
    %111 = vmatprep.subr.mxu0 0.0
    %112 = vmatpush1.xpose.msra.mxu0 %v56
    %113 = vmatprep.subr.mxu0 0.0
    %114 = vmatpush1.xpose.msra.mxu0 %v57
    %115 = vmatprep.subr.mxu0 0.0
    %116 = vmatpush1.xpose.msra.mxu0 %v58
    %117 = vmatprep.subr.mxu0 0.0
    %118 = vmatpush1.xpose.msra.mxu0 %v59
    %119 = vmatprep.subr.mxu0 0.0
    %120 = vmatpush1.xpose.msra.mxu0 %v60
    %121 = vmatprep.subr.mxu0 0.0
    %122 = vmatpush1.xpose.msra.mxu0 %v61
    %123 = vmatprep.subr.mxu0 0.0
    %124 = vmatpush1.xpose.msra.mxu0 %v62
    %125 = vmatprep.subr.mxu0 0.0
    %126 = vmatpush1.xpose.msra.mxu0 %v63
    %127 = vmatprep.subr.mxu0 0.0
    %128 = vmatpush1.xpose.msra.mxu0 %v64
    %129 = vmatprep.subr.mxu0 0.0
    %130 = vmatpush1.xpose.msra.mxu0 %v65
    %131 = vmatprep.subr.mxu0 0.0
    %132 = vmatpush1.xpose.msra.mxu0 %v66
    %133 = vmatprep.subr.mxu0 0.0
    %134 = vmatpush1.xpose.msra.mxu0 %v67
    %135 = vmatprep.subr.mxu0 0.0
    %136 = vmatpush1.xpose.msra.mxu0 %v68
    %137 = vmatprep.subr.mxu0 0.0
    %138 = vmatpush1.xpose.msra.mxu0 %v69
    %139 = vmatprep.subr.mxu0 0.0
    %140 = vmatpush1.xpose.msra.mxu0 %v70
    %141 = vmatprep.subr.mxu0 0.0
    %142 = vmatpush1.xpose.msra.mxu0 %v71
    %143 = vmatprep.subr.mxu0 0.0
    %144 = vmatpush1.xpose.msra.mxu0 %v72
    %145 = vmatprep.subr.mxu0 0.0
    %146 = vmatpush1.xpose.msra.mxu0 %v73
    %147 = vmatprep.subr.mxu0 0.0
    %148 = vmatpush1.xpose.msra.mxu0 %v74
    %149 = vmatprep.subr.mxu0 0.0
    %150 = vmatpush1.xpose.msra.mxu0 %v75
    %151 = vmatprep.subr.mxu0 0.0
    %152 = vmatpush1.xpose.msra.mxu0 %v76
    %153 = vmatprep.mubr.f32.mxu0 0.0
    %154 = vmatmul.mubr.f32.gmra.mrb[0].mxu0 %v43
    %v155 = vpop.f32.mrb[0].mxu0
    %v156 = vadd.f32 %v82, %v155
    %v157 = vpop.f32.mrb[0].mxu0
    %v158 = vadd.f32 %v86, %v157
    %159 = vmatprep.mubr.f32.mxu0 0.0
    %160 = vmatmul.mubr.f32.gmra.mrb[0].mxu0 %v44
    %v161 = vpop.f32.mrb[0].mxu0
    %v162 = vadd.f32 %v82, %v161
    %v163 = vpop.f32.mrb[0].mxu0
    %v164 = vadd.f32 %v86, %v163
    %165 = vdwg.mxu0
    %166 = vst [vmem:[#allocation7] sm:$0xff] %v156
    %167 = vst [vmem:[#allocation7 + $0x8] sm:$0xff] %v158
    %168 = vst [vmem:[#allocation7 + $0x10] sm:$0xff] %v162
    %169 = vst [vmem:[#allocation7 + $0x18] sm:$0xff] %v164
    // Predicated region
    $region22: #{tpu_custom_call.1} parent=1 // pred_check
      _
    $region23: #{tpu_custom_call.1} parent=1 // pred_check_branch
      %171 = sbr.rel (0) target = $region25
    $region24: #{tpu_custom_call.1} parent=1 // pred_region
      %s173 = ssub.s32 512, 512
      %174 = vsyncadd [#allocation4], %s173
      %s175 = sshll.u32 [#allocation7], 4
      %s176 = int_to_ptr.vmem [resolvable:$true] %s175
      %181 = dma.vmem_to_hbm [thread:$0]  %s176, 512, %s3, [#allocation4], 256, 256, 16
    $region25: #{tpu_custom_call.1} parent=1 // pred_fallthru
      _
    // Predicated region
    $region26: #{tpu_custom_call.1} parent=1 // pred_check
      _
    $region27: #{tpu_custom_call.1} parent=1 // pred_check_branch
      %183 = sbr.rel (0) target = $region29
    $region28: #{tpu_custom_call.1} parent=1 // pred_region
      %184 = dma.done [#allocation4], 512
    $region29: #{tpu_custom_call.1} parent=1 // pred_fallthru
      _
    %185 = vsyncpa [#allocation3], 1
    %186 = vsyncpa [#allocation6], 1
    %187 = vsyncpa [#allocation4], 1

</llo_original>
